<compile_context>
chip_gen: v7x
topology: tpu7x:2x2x1
jax: 0.10.0
libtpu: 0.0.40
codegen_flags: <defaults>
</compile_context>

<pallas_src>
import functools

import jax
import jax.numpy as jnp
import numpy as np
from jax import lax
from jax.experimental import pallas as pl
from jax.experimental.pallas import tpu as pltpu

NUM_GROUPS = 32
EPS = 1e-5


# ----------------------------------------------------------------------------
# Tile / VMEM helpers
# ----------------------------------------------------------------------------
def _pick_tile(n, cap=256):
    """Largest multiple-of-8 divisor of n that is <= cap; else n (full dim)."""
    if n <= cap:
        return n
    for t in range(cap, 7, -8):
        if n % t == 0:
            return t
    return n  # pathological (n not divisible by any multiple of 8 <= cap)


def _vmem_limit_bytes():
    try:
        cap = int(pltpu.get_tpu_info().vmem_capacity_bytes)
    except Exception:
        cap = 64 * 1024 * 1024  # conservative fallback (works on v7x too)
    # leave headroom: 3/4 of physical, capped at 96 MiB (v5e/v6e: 96 MiB,
    # v7x: 48 MiB).
    return int(min(cap * 3 // 4, 96 * 1024 * 1024))


# ----------------------------------------------------------------------------
# Kernel A1: row-tiled per-channel sum / sum-of-squares (GroupNorm stats).
# grid = (B, hw_tiles); hw_tiles is the trailing reduction axis, the output
# block stays resident and accumulates.
# ----------------------------------------------------------------------------
def stats_kernel(x_ref, stats_ref):
    r = pl.program_id(1)

    @pl.when(r == 0)
    def _():
        stats_ref[...] = jnp.zeros_like(stats_ref)

    x = x_ref[0]                                           # (TR, C) f32
    s = jnp.sum(x, axis=0, keepdims=True)                  # (1, C)
    sq = jnp.sum(x * x, axis=0, keepdims=True)             # (1, C)
    stats_ref[0] += jnp.concatenate([s, sq], axis=0)       # (2, C)


# ----------------------------------------------------------------------------
# Kernel A2: GroupNorm apply (precomputed scale/shift) + fused qkv matmuls.
# Outputs are full-width lane-dense bf16 slabs: q (HW, C), kv (HW, 2C).
# ----------------------------------------------------------------------------
def norm_qkv_kernel(x_ref, scale_ref, shift_ref, wq_ref, wkv_ref, bq_ref,
                    bkv_ref, q_ref, kv_ref):
    x = x_ref[0]                                           # (TR, C) f32
    h = x * scale_ref[0] + shift_ref[0]                    # GroupNorm affine
    hb = h.astype(jnp.bfloat16)

    q = jnp.dot(hb, wq_ref[...],
                preferred_element_type=jnp.float32) + bq_ref[...]     # (TR, C)
    kv = jnp.dot(hb, wkv_ref[...],
                 preferred_element_type=jnp.float32) + bkv_ref[...]   # (TR, 2C)

    q_ref[0] = q.astype(jnp.bfloat16)
    kv_ref[0] = kv.astype(jnp.bfloat16)


# ----------------------------------------------------------------------------
# Kernel B: per-query-tile attention over all heads (static in-kernel loop),
# one full-C projection matmul, bias, residual.  KV slab is resident per batch.
# ----------------------------------------------------------------------------
def attn_proj_kernel(x_ref, q_ref, kv_ref, wproj_ref, bproj_ref, out_ref, *,
                     num_heads, head_dim):
    C = num_heads * head_dim
    q_all = q_ref[0]                                       # (TQ, C)   bf16
    kv = kv_ref[0]                                         # (HW, 2C)  bf16
    scale = head_dim ** -0.5

    outs = []
    for h in range(num_heads):
        lo = h * head_dim
        q_h = q_all[:, lo:lo + head_dim]                   # (TQ, hd)
        k_h = kv[:, lo:lo + head_dim]                      # (HW, hd)
        v_h = kv[:, C + lo:C + lo + head_dim]              # (HW, hd)

        # QK^T via dot_general (contract last dims; no explicit transpose).
        s = lax.dot_general(q_h, k_h, (((1,), (1,)), ((), ())),
                            preferred_element_type=jnp.float32) * scale
        s = s - jnp.max(s, axis=-1, keepdims=True)
        p = jnp.exp(s)
        p = p * pl.reciprocal(jnp.sum(p, axis=-1, keepdims=True), approx=True)

        o_h = jnp.dot(p.astype(jnp.bfloat16), v_h,
                      preferred_element_type=jnp.float32)  # (TQ, hd)
        outs.append(o_h.astype(jnp.bfloat16))

    o = jnp.concatenate(outs, axis=-1)                     # (TQ, C) bf16
    proj = jnp.dot(o, wproj_ref[...],
                   preferred_element_type=jnp.float32) + bproj_ref[...]
    out_ref[0] = x_ref[0] + proj                           # residual


# ----------------------------------------------------------------------------
# Wrapper
# ----------------------------------------------------------------------------
def attention_block(x_nchw, params, num_heads):
    B, C, H, W = x_nchw.shape
    assert C % NUM_GROUPS == 0 and C % num_heads == 0
    HW = H * W
    nh = num_heads
    hd = C // nh
    gs = C // NUM_GROUPS

    TQ = _pick_tile(HW, 256)      # query / row tile (capped for v7x VMEM)
    nq = HW // TQ
    TR = TQ
    nr = HW // TR

    vmem_limit = _vmem_limit_bytes()

    # NCHW -> (B, HW, C)
    x_t = jnp.transpose(x_nchw.reshape(B, C, HW), (0, 2, 1)).astype(jnp.float32)

    gamma = params["gamma"].reshape(C).astype(jnp.float32)
    beta = params["beta"].reshape(C).astype(jnp.float32)
    wqkv_t = params["wqkv"].reshape(3 * C, C).T.astype(jnp.bfloat16)  # (C, 3C)
    wq = wqkv_t[:, :C]                                                # (C, C)
    wkv = wqkv_t[:, C:]                                               # (C, 2C)
    bqkv = params["bqkv"].reshape(3 * C).astype(jnp.float32)
    bq = bqkv[:C].reshape(1, C)
    bkv = bqkv[C:].reshape(1, 2 * C)
    wproj = params["wproj"].reshape(C, C).T.astype(jnp.bfloat16)      # (C, C)
    bproj = params["bproj"].reshape(1, C).astype(jnp.float32)

    # -------------------- Kernel A1: GroupNorm statistics ---------------------
    stats = pl.pallas_call(
        stats_kernel,
        out_shape=jax.ShapeDtypeStruct((B, 2, C), jnp.float32),
        grid_spec=pltpu.PrefetchScalarGridSpec(
            num_scalar_prefetch=0,
            grid=(B, nr),
            in_specs=[pl.BlockSpec((1, TR, C), lambda b, r: (b, r, 0))],
            out_specs=pl.BlockSpec((1, 2, C), lambda b, r: (b, 0, 0)),
        ),
        compiler_params=pltpu.CompilerParams(
            dimension_semantics=("parallel", "arbitrary"),
            vmem_limit_bytes=vmem_limit),
    )(x_t)

    # Tiny (B x C) epilogue in XLA: group reduce -> per-channel scale/shift.
    # NOTE: E[x^2]-mean^2 in f32; fine at the 2e-2 tolerance used here.
    n_elem = jnp.float32(gs * HW)
    sum_g = stats[:, 0, :].reshape(B, NUM_GROUPS, gs).sum(axis=-1)
    sq_g = stats[:, 1, :].reshape(B, NUM_GROUPS, gs).sum(axis=-1)
    mean_g = sum_g / n_elem
    var_g = sq_g / n_elem - mean_g * mean_g
    inv_g = lax.rsqrt(var_g + EPS)
    mean_c = jnp.repeat(mean_g, gs, axis=-1)               # (B, C)
    inv_c = jnp.repeat(inv_g, gs, axis=-1)                 # (B, C)
    scale2 = gamma[None, :] * inv_c
    shift2 = beta[None, :] - mean_c * scale2
    scale = scale2.reshape(B, 1, C)
    shift = shift2.reshape(B, 1, C)

    # -------------------- Kernel A2: normalize + qkv ---------------------------
    q_slab, kv_slab = pl.pallas_call(
        norm_qkv_kernel,
        out_shape=(
            jax.ShapeDtypeStruct((B, HW, C), jnp.bfloat16),
            jax.ShapeDtypeStruct((B, HW, 2 * C), jnp.bfloat16),
        ),
        grid_spec=pltpu.PrefetchScalarGridSpec(
            num_scalar_prefetch=0,
            grid=(B, nr),
            in_specs=[
                pl.BlockSpec((1, TR, C), lambda b, r: (b, r, 0)),      # x
                pl.BlockSpec((1, 1, C), lambda b, r: (b, 0, 0)),       # scale
                pl.BlockSpec((1, 1, C), lambda b, r: (b, 0, 0)),       # shift
                pl.BlockSpec((C, C), lambda b, r: (0, 0)),             # Wq
                pl.BlockSpec((C, 2 * C), lambda b, r: (0, 0)),         # Wkv
                pl.BlockSpec((1, C), lambda b, r: (0, 0)),             # bq
                pl.BlockSpec((1, 2 * C), lambda b, r: (0, 0)),         # bkv
            ],
            out_specs=(
                pl.BlockSpec((1, TR, C), lambda b, r: (b, r, 0)),
                pl.BlockSpec((1, TR, 2 * C), lambda b, r: (b, r, 0)),
            ),
        ),
        compiler_params=pltpu.CompilerParams(
            dimension_semantics=("parallel", "parallel"),
            vmem_limit_bytes=vmem_limit),
    )(x_t, scale, shift, wq, wkv, bq, bkv)

    # ---------------- Kernel B: attention + proj + residual --------------------
    out = pl.pallas_call(
        functools.partial(attn_proj_kernel, num_heads=nh, head_dim=hd),
        out_shape=jax.ShapeDtypeStruct((B, HW, C), jnp.float32),
        grid_spec=pltpu.PrefetchScalarGridSpec(
            num_scalar_prefetch=0,
            grid=(B, nq),
            in_specs=[
                pl.BlockSpec((1, TQ, C), lambda b, qt: (b, qt, 0)),        # x
                pl.BlockSpec((1, TQ, C), lambda b, qt: (b, qt, 0)),        # q
                # KV depends only on b -> fetched once per batch, resident
                # across all query tiles (no nq-fold re-DMA).
                pl.BlockSpec((1, HW, 2 * C), lambda b, qt: (b, 0, 0)),     # kv
                pl.BlockSpec((C, C), lambda b, qt: (0, 0)),                # Wproj
                pl.BlockSpec((1, C), lambda b, qt: (0, 0)),                # bproj
            ],
            out_specs=pl.BlockSpec((1, TQ, C), lambda b, qt: (b, qt, 0)),
        ),
        compiler_params=pltpu.CompilerParams(
            dimension_semantics=("parallel", "parallel"),
            vmem_limit_bytes=vmem_limit),
    )(x_t, q_slab, kv_slab, wproj, bproj)

    # (B, HW, C) -> NCHW
    return jnp.transpose(out, (0, 2, 1)).reshape(B, C, H, W)


# ----------------------------------------------------------------------------
# Pure-JAX reference matching the PyTorch forward exactly.
# ----------------------------------------------------------------------------
def reference(x, params, num_heads):
    B, C, H, W = x.shape
    hd = C // num_heads
    xr = x.reshape(B, NUM_GROUPS, C // NUM_GROUPS, H, W)
    mean = xr.mean(axis=(2, 3, 4), keepdims=True)
    var = xr.var(axis=(2, 3, 4), keepdims=True)
    h = ((xr - mean) / jnp.sqrt(var + EPS)).reshape(B, C, H, W)
    h = h * params["gamma"].reshape(1, C, 1, 1) + params["beta"].reshape(1, C, 1, 1)
    qkv = (jnp.einsum("bchw,oc->bohw", h, params["wqkv"].reshape(3 * C, C))
           + params["bqkv"].reshape(1, 3 * C, 1, 1))
    q, k, v = jnp.split(qkv, 3, axis=1)
    q = q.reshape(B, num_heads, hd, H * W)
    k = k.reshape(B, num_heads, hd, H * W)
    v = v.reshape(B, num_heads, hd, H * W)
    attn = jnp.einsum("bhdn,bhdm->bhnm", q, k) * hd ** (-0.5)
    attn = jax.nn.softmax(attn, axis=-1)
    out = jnp.einsum("bhnm,bhdm->bhdn", attn, v).reshape(B, C, H, W)
    out = (jnp.einsum("bchw,oc->bohw", out, params["wproj"].reshape(C, C))
           + params["bproj"].reshape(1, C, 1, 1))
    return x + out


if __name__ == "__main__":
    # channels must be divisible by both num_heads and the 32 GroupNorm groups
    B, C, H, W = 2, 64, 8, 8
    num_heads = 4

    key = jax.random.PRNGKey(0)
    ks = jax.random.split(key, 7)
    params = {
        "gamma": 1.0 + 0.1 * jax.random.normal(ks[0], (C,), jnp.float32),
        "beta": 0.1 * jax.random.normal(ks[1], (C,), jnp.float32),
        "wqkv": 0.1 * jax.random.normal(ks[2], (3 * C, C, 1, 1), jnp.float32),
        "bqkv": 0.1 * jax.random.normal(ks[3], (3 * C,), jnp.float32),
        "wproj": 0.1 * jax.random.normal(ks[4], (C, C, 1, 1), jnp.float32),
        "bproj": 0.1 * jax.random.normal(ks[5], (C,), jnp.float32),
    }
    x = jax.random.normal(ks[6], (B, C, H, W), jnp.float32)

    out = jax.block_until_ready(attention_block(x, params, num_heads))
    ref = jax.block_until_ready(reference(x, params, num_heads))
    # bf16 MXU operands + approx reciprocal -> slightly looser tolerance
    np.testing.assert_allclose(np.asarray(out), np.asarray(ref),
                               rtol=2e-2, atol=2e-2)
    print("KERNEL_OK")
</pallas_src>

<mosaic_0001>
module attributes {stable_mosaic.version = 11 : i64} {
  func.func @stats_kernel(%arg0: i32, %arg1: i32, %arg2: memref<1x64x64xf32, #tpu.memory_space<vmem>>, %arg3: memref<1x2x64xf32, #tpu.memory_space<vmem>>) attributes {dimension_semantics = [#tpu.dimension_semantics<parallel>, #tpu.dimension_semantics<arbitrary>], iteration_bounds = array<i64: 2, 1>, scalar_prefetch = 0 : i64, scratch_operands = 0 : i64, tpu.core_type = #tpu.core_type<tc>, window_params = [{transform_indices = @transform_0, window_bounds = array<i64: 1, 64, 64>}, {transform_indices = @transform_1, window_bounds = array<i64: 1, 2, 64>}]} {
    %c0_i32 = arith.constant 0 : i32
    %0 = arith.cmpi eq, %arg1, %c0_i32 : i32
    %1 = arith.extui %0 : i1 to i32
    %c0_i32_0 = arith.constant 0 : i32
    %2 = arith.cmpi ne, %1, %c0_i32_0 : i32
    scf.if %2 {
      %cst_10 = arith.constant 0.000000e+00 : f32
      %17 = vector.broadcast %cst_10 : f32 to vector<1x2x64xf32>
      %c0_11 = arith.constant 0 : index
      %c0_12 = arith.constant 0 : index
      %c0_13 = arith.constant 0 : index
      %18 = vector.load %arg3[%c0_11, %c0_12, %c0_13] : memref<1x2x64xf32, #tpu.memory_space<vmem>>, vector<1x2x64xf32>
      tpu.vector_store %arg3[%c0_11, %c0_12, %c0_13], %17 {strides = array<i32>} : memref<1x2x64xf32, #tpu.memory_space<vmem>>, vector<1x2x64xf32>,
    } else {
    }
    %c0 = arith.constant 0 : index
    %c0_1 = arith.constant 0 : index
    %c0_2 = arith.constant 0 : index
    %3 = vector.load %arg2[%c0, %c0_1, %c0_2] : memref<1x64x64xf32, #tpu.memory_space<vmem>>, vector<1x64x64xf32>
    %4 = vector.shape_cast %3 : vector<1x64x64xf32> to vector<64x64xf32>
    %cst = arith.constant dense<0.000000e+00> : vector<64xf32>
    %5 = vector.multi_reduction <add>, %4, %cst [0] : vector<64x64xf32> to vector<64xf32>
    %6 = vector.shape_cast %5 : vector<64xf32> to vector<1x64xf32>
    %7 = arith.mulf %4, %4 : vector<64x64xf32>
    %cst_3 = arith.constant dense<0.000000e+00> : vector<64xf32>
    %8 = vector.multi_reduction <add>, %7, %cst_3 [0] : vector<64x64xf32> to vector<64xf32>
    %9 = vector.shape_cast %8 : vector<64xf32> to vector<1x64xf32>
    %c0_4 = arith.constant 0 : index
    %c0_5 = arith.constant 0 : index
    %c0_6 = arith.constant 0 : index
    %10 = vector.load %arg3[%c0_4, %c0_5, %c0_6] : memref<1x2x64xf32, #tpu.memory_space<vmem>>, vector<1x2x64xf32>
    %11 = vector.shape_cast %10 : vector<1x2x64xf32> to vector<2x64xf32>
    %12 = tpu.concatenate %6, %9 in 0 : vector<1x64xf32>, vector<1x64xf32> -> vector<2x64xf32>
    %13 = arith.addf %11, %12 : vector<2x64xf32>
    %c0_7 = arith.constant 0 : index
    %c0_8 = arith.constant 0 : index
    %c0_9 = arith.constant 0 : index
    %14 = vector.load %arg3[%c0_7, %c0_8, %c0_9] : memref<1x2x64xf32, #tpu.memory_space<vmem>>, vector<1x2x64xf32>
    %15 = vector.shape_cast %14 : vector<1x2x64xf32> to vector<2x64xf32>
    %16 = vector.shape_cast %13 : vector<2x64xf32> to vector<1x2x64xf32>
    tpu.vector_store %arg3[%c0_7, %c0_8, %c0_9], %16 {strides = array<i32>} : memref<1x2x64xf32, #tpu.memory_space<vmem>>, vector<1x2x64xf32>,
    return
  }
  func.func @transform_0(%arg0: i32, %arg1: i32) -> (i32, i32, i32) {
    %c0_i32 = arith.constant 0 : i32
    %c0_i32_0 = arith.constant 0 : i32
    return %arg0, %arg1, %c0_i32 : i32, i32, i32
  }
  func.func @transform_1(%arg0: i32, %arg1: i32) -> (i32, i32, i32) {
    %c0_i32 = arith.constant 0 : i32
    %c0_i32_0 = arith.constant 0 : i32
    %c0_i32_1 = arith.constant 0 : i32
    return %arg0, %c0_i32, %c0_i32_0 : i32, i32, i32
  }
}

</mosaic_0001>

<llo_original>
// kernel: tpu_custom_call.1
$region0: #{tpu_custom_call.1}
  #allocation0 [shape = 'u32[]', space=smem, size = 0x4, offset = 0x4, fixed_abs, tag = 'smem constant byte address 0x4 - core index']
  #allocation1 [shape = 'u32[144,128]{1,0:T(1,128)}', space=vmem, size = 0x12000, scoped, tag = 'internal scratch']
  %s0 = inlined_call_operand.hbm [shape: f32[2,64,64], index: 0, kind: input, shape index: {}]
  %s1 = inlined_call_operand.hbm [shape: f32[2,2,64], index: 1, kind: output, shape index: {}]
  %s2 = sld [smem:[#allocation0]]
  $region45: #{tpu_custom_call.1} parent=0
    _
  %s4 = ssub.s32 1, %s2
  %s5 = scalar_select 0, %s4, %s2
  $region1: #{tpu_custom_call.1} parent=0
    #allocation2 [shape = 'u8[65536]{0}', space=vmem, size = 0x10000, scoped, tag = 'input window, operand 0']
    #allocation3 [shape = 's32[2]{0}', space=sflag, size = 0x8, scoped, tag = 'scoped memory for tpu_custom_call.1']
    #allocation4 [shape = 's32[2]{0}', space=sflag, size = 0x8, scoped, tag = 'scoped memory for tpu_custom_call.1']
    #allocation5 [shape = 'u8[2048]{0}', space=vmem, size = 0x800, scoped, tag = 'output window, operand 0']
    %6 = vsyncpa [#allocation3], 0
    %s7 = scalar_lea.sflag [#allocation3], 1
    %8 = vsyncpa %s7, 0
    %9 = vsyncpa [#allocation4], 0
    %s10 = scalar_lea.sflag [#allocation4], 1
    %11 = vsyncpa %s10, 0
    loop: start=0, step=1, limit=4
    $region2: #{tpu_custom_call.1} parent=1 // loop_pre_header
      _
    $region3: #{tpu_custom_call.1} parent=1 // loop_header
      %s13 = sphi 0, %s17
      %p14 = scmp.ge.s32.totalorder %s13, 4
      %s20 = sphi 0, %s32
      %s21 = sphi 0, %s28
      %s22 = sphi 0, %s20
      %s23 = sphi 0, %s21
      %s24 = sphi 0, %s22
      %s25 = sphi 0, %s23
      %s37 = sphi 0, %s39
      %s40 = sphi 0, %s37
      %s41 = sphi 0, %s40
      %s57 = sphi 0, %s41
      %s63 = sphi 0, %s65
      %s66 = sphi 0, %s63
      %s67 = sphi 0, %s66
      %s83 = sphi 0, %s67
    $region4: #{tpu_custom_call.1} parent=1 // loop_header_branch
      %16 = sbr.rel (%p14) target = $region8
    $region5: #{tpu_custom_call.1} parent=1 // loop_body
      %s18 = ssub.s32 %s13, 1
      %s19 = ssub.s32 %s13, 2
      %s26 = sadd.s32 1, %s21
      %p27 = scmp.ge.s32.totalorder %s26, 1
      %s28 = scalar_select %p27, 0, %s26
      %s29 = sadd.s32 1, %s20
      %s30 = scalar_select %p27, %s29, %s20
      %p31 = scmp.ge.s32.totalorder %s30, 2
      %s32 = scalar_select %p31, 0, %s30
      %s33 = ssub.s32 %s20, %s32
      %s34 = ssub.s32 %s21, %s28
      %s35 = sor.u32 %s33, %s34
      %p36 = scmp.eq.s32.totalorder %s35, 0
      %s38 = sadd.s32 %s37, 1
      %s39 = scalar_select %p36, %s37, %s38
      %p42 = pneg %p36
      %p43 = scmp.eq.s32.totalorder %s13, 1
      %p44 = por %p42, %p43
      %p45 = scmp.ne.s32.totalorder %s37, %s40
      %p46 = scmp.eq.s32.totalorder %s13, 0
      %p47 = por %p45, %p46
      %p48 = scmp.ne.s32.totalorder %s37, %s40
      %p49 = scmp.eq.s32.totalorder %s18, 1
      %p50 = por %p48, %p49
      %p51 = scmp.ne.s32.totalorder %s40, %s41
      %p52 = scmp.eq.s32.totalorder %s18, 0
      %p53 = por %p51, %p52
      %p54 = scmp.ne.s32.totalorder %s40, %s41
      %p55 = scmp.eq.s32.totalorder %s19, 1
      %p56 = por %p54, %p55
      %p58 = scmp.ne.s32.totalorder %s41, %s57
      %p59 = scmp.eq.s32.totalorder %s19, 0
      %p60 = por %p58, %p59
      %s61 = ssub.s32 %s20, %s32
      %p62 = scmp.eq.s32.totalorder %s61, 0
      %s64 = sadd.s32 %s63, 1
      %s65 = scalar_select %p62, %s63, %s64
      %p68 = pneg %p62
      %p69 = scmp.eq.s32.totalorder %s13, 1
      %p70 = por %p68, %p69
      %p71 = scmp.ne.s32.totalorder %s63, %s66
      %p72 = scmp.eq.s32.totalorder %s13, 0
      %p73 = por %p71, %p72
      %p74 = scmp.ne.s32.totalorder %s63, %s66
      %p75 = scmp.eq.s32.totalorder %s18, 1
      %p76 = por %p74, %p75
      %p77 = scmp.ne.s32.totalorder %s66, %s67
      %p78 = scmp.eq.s32.totalorder %s18, 0
      %p79 = por %p77, %p78
      %p80 = scmp.ne.s32.totalorder %s66, %s67
      %p81 = scmp.eq.s32.totalorder %s19, 1
      %p82 = por %p80, %p81
      %p84 = scmp.ne.s32.totalorder %s67, %s83
      %p85 = scmp.eq.s32.totalorder %s19, 0
      %p86 = por %p84, %p85
      %p87 = scmp.le.s32.totalorder 1, %s13
      %p88 = scmp.lt.s32.totalorder %s13, 3
      %p89 = pnand %p87, %p88
      %p90 = pneg %p89
      // Predicated region
      $region9: #{tpu_custom_call.1} parent=5 // pred_check
        _
      $region10: #{tpu_custom_call.1} parent=5 // pred_check_branch
        %92 = sbr.rel (%p89) target = $region12
      $region11: #{tpu_custom_call.1} parent=5 // pred_region
        %s93 = ssub.s32 %s13, 1
      $region12: #{tpu_custom_call.1} parent=5 // pred_fallthru
        _
      %p94 = scmp.lt.s32.totalorder %s13, 2
      // Predicated region
      $region13: #{tpu_custom_call.1} parent=5 // pred_check
        %p95 = pneg %p94
      $region14: #{tpu_custom_call.1} parent=5 // pred_check_branch
        %97 = sbr.rel (%p95) target = $region16
      $region15: #{tpu_custom_call.1} parent=5 // pred_region
        // Predicated region
        $region17: #{tpu_custom_call.1} parent=15 // pred_check
          %p98 = pneg %p47
        $region18: #{tpu_custom_call.1} parent=15 // pred_check_branch
          %100 = sbr.rel (%p98) target = $region20
        $region19: #{tpu_custom_call.1} parent=15 // pred_region
          %s101 = sand.u32 %s37, 1
          %s102 = scalar_lea.sflag [#allocation3], %s101
          %s103 = sand.u32 %s37, 1
          %s104 = smul.addr %s103, 64
          %s105 = scalar_lea.vmem [#allocation2], %s104
          %s106 = smul.u32 8, %s21
          %s108 = ssub.s32 1024, 1024
          %109 = vsyncadd %s102, %s108
          %s110 = smul.addr %s20, 8
          %s111 = sadd.s32 %s106, %s110
          %s112 = smul.addr %s111, 128
          %s113 = scalar_lea.hbm %s0, %s112
          %s114 = sshll.u32 %s105, 4
          %s115 = int_to_ptr.vmem [resolvable:$true] %s114
          %120 = dma.hbm_to_vmem [thread:$0]  %s113, 1024, %s115, %s102, 128, 128, 8
        $region20: #{tpu_custom_call.1} parent=15 // pred_fallthru
          _
      $region16: #{tpu_custom_call.1} parent=5 // pred_fallthru
        _
      %p121 = scmp.le.s32.totalorder 1, %s13
      %p122 = scmp.lt.s32.totalorder %s13, 3
      %p123 = pnand %p121, %p122
      %p124 = pneg %p123
      // Predicated region
      $region21: #{tpu_custom_call.1} parent=5 // pred_check
        _
      $region22: #{tpu_custom_call.1} parent=5 // pred_check_branch
        %126 = sbr.rel (%p123) target = $region24
      $region23: #{tpu_custom_call.1} parent=5 // pred_region
        %s127 = ssub.s32 %s13, 1
        %s128 = sand.u32 %s40, 1
        %s129 = scalar_lea.sflag [#allocation3], %s128
        %s130 = sand.u32 %s40, 1
        %s131 = smul.addr %s130, 64
        %s132 = scalar_lea.vmem [#allocation2], %s131
        // Predicated region
        $region25: #{tpu_custom_call.1} parent=23 // pred_check
          %p133 = pneg %p53
        $region26: #{tpu_custom_call.1} parent=23 // pred_check_branch
          %135 = sbr.rel (%p133) target = $region28
        $region27: #{tpu_custom_call.1} parent=23 // pred_region
          %136 = dma.done %s129, 1024
        $region28: #{tpu_custom_call.1} parent=23 // pred_fallthru
          _
        %s137 = sand.u32 %s40, 1
        %s138 = scalar_lea.sflag [#allocation3], %s137
        %s139 = sand.u32 %s40, 1
        %s140 = smul.addr %s139, 64
        %s141 = scalar_lea.vmem [#allocation2], %s140
        %p142 = pneg %p53
        %p143 = pneg %p50
        %p144 = pneg %p79
        %p145 = pneg %p76
        %s146 = sand.u32 %s66, 1
        %s147 = scalar_lea.sflag [#allocation4], %s146
        %s148 = sand.u32 %s66, 1
        %s149 = smul.addr %s148, 2
        %s150 = scalar_lea.vmem [#allocation5], %s149
        %s151 = smul.u32 8, %s23
        %p152 = scmp.eq.s32.totalorder %s23, 0
        // Predicated region
        $region29: #{tpu_custom_call.1} parent=23 // pred_check
          %p153 = pneg %p152
        $region30: #{tpu_custom_call.1} parent=23 // pred_check_branch
          %155 = sbr.rel (%p153) target = $region32
        $region31: #{tpu_custom_call.1} parent=23 // pred_region
          %vm156 = vcmask 517120
          %157 = vst.msk [vmem:[%s150] sm:$0x3] %vm156, 0.0
        $region32: #{tpu_custom_call.1} parent=23 // pred_fallthru
          _
        %v158 = vld [vmem:[%s132] sm:$0xff]
        %v159 = vld [vmem:[%s132 + $0x8] sm:$0xff]
        %v160 = vld [vmem:[%s132 + $0x10] sm:$0xff]
        %v161 = vld [vmem:[%s132 + $0x18] sm:$0xff]
        %v162 = vld [vmem:[%s132 + $0x20] sm:$0xff]
        %v163 = vld [vmem:[%s132 + $0x28] sm:$0xff]
        %v164 = vld [vmem:[%s132 + $0x30] sm:$0xff]
        %v165 = vld [vmem:[%s132 + $0x38] sm:$0xff]
        %vm166 = vcmask 523264
        %v167 = vsel %vm166, %v158, 0.0
        %v168 = vsel %vm166, %v159, 0.0
        %v169 = vadd.f32 %v167, %v168
        %v170 = vsel %vm166, %v160, 0.0
        %v171 = vadd.f32 %v169, %v170
        %v172 = vsel %vm166, %v161, 0.0
        %v173 = vadd.f32 %v171, %v172
        %v174 = vsel %vm166, %v162, 0.0
        %v175 = vadd.f32 %v173, %v174
        %v176 = vsel %vm166, %v163, 0.0
        %v177 = vadd.f32 %v175, %v176
        %v178 = vsel %vm166, %v164, 0.0
        %v179 = vadd.f32 %v177, %v178
        %v180 = vsel %vm166, %v165, 0.0
        %v181 = vadd.f32 %v179, %v180
        %v182 = vrot.slane %v181, 4
        %v183 = vadd.f32 %v181, %v182
        %v184 = vrot.slane %v183, 2
        %v185 = vadd.f32 %v183, %v184
        %v186 = vrot.slane %v185, 1
        %v187 = vadd.f32 %v185, %v186
        %v188 = vmul.f32 %v158, %v158
        %v189 = vmul.f32 %v159, %v159
        %v190 = vmul.f32 %v160, %v160
        %v191 = vmul.f32 %v161, %v161
        %v192 = vmul.f32 %v162, %v162
        %v193 = vmul.f32 %v163, %v163
        %v194 = vmul.f32 %v164, %v164
        %v195 = vmul.f32 %v165, %v165
        %v196 = vsel %vm166, %v188, 0.0
        %v197 = vsel %vm166, %v189, 0.0
        %v198 = vadd.f32 %v196, %v197
        %v199 = vsel %vm166, %v190, 0.0
        %v200 = vadd.f32 %v198, %v199
        %v201 = vsel %vm166, %v191, 0.0
        %v202 = vadd.f32 %v200, %v201
        %v203 = vsel %vm166, %v192, 0.0
        %v204 = vadd.f32 %v202, %v203
        %v205 = vsel %vm166, %v193, 0.0
        %v206 = vadd.f32 %v204, %v205
        %v207 = vsel %vm166, %v194, 0.0
        %v208 = vadd.f32 %v206, %v207
        %v209 = vsel %vm166, %v195, 0.0
        %v210 = vadd.f32 %v208, %v209
        %v211 = vrot.slane %v210, 4
        %v212 = vadd.f32 %v210, %v211
        %v213 = vrot.slane %v212, 2
        %v214 = vadd.f32 %v212, %v213
        %v215 = vrot.slane %v214, 1
        %v216 = vadd.f32 %v214, %v215
        %v217 = vld [vmem:[%s150] sm:$0x3]
        %vm218 = vcmask 1040384
        %v219 = vsel %vm218, %v187, %v216
        %v220 = vadd.f32 %v217, %v219
        %vm221 = vcmask 517120
        %222 = vst.msk [vmem:[%s150] sm:$0x3] %vm221, %v220
        %s223 = sand.u32 %s66, 1
        %s224 = scalar_lea.sflag [#allocation4], %s223
        %s225 = sand.u32 %s66, 1
        %s226 = smul.addr %s225, 2
        %s227 = scalar_lea.vmem [#allocation5], %s226
        // Predicated region
        $region33: #{tpu_custom_call.1} parent=23 // pred_check
          %p228 = pneg %p76
        $region34: #{tpu_custom_call.1} parent=23 // pred_check_branch
          %230 = sbr.rel (%p228) target = $region36
        $region35: #{tpu_custom_call.1} parent=23 // pred_region
          %s232 = ssub.s32 32, 32
          %233 = vsyncadd %s224, %s232
          %s234 = smul.addr %s22, 32
          %s235 = scalar_lea.hbm %s1, %s234
          %s237 = sshll.u32 %s227, 4
          %s238 = int_to_ptr.vmem [resolvable:$true] %s237
          %240 = dma.vmem_to_hbm [thread:$0]  %s238, 32, %s235, %s224
        $region36: #{tpu_custom_call.1} parent=23 // pred_fallthru
          _
      $region24: #{tpu_custom_call.1} parent=5 // pred_fallthru
        _
      %p241 = scmp.le.s32.totalorder 2, %s13
      // Predicated region
      $region37: #{tpu_custom_call.1} parent=5 // pred_check
        %p242 = pneg %p241
      $region38: #{tpu_custom_call.1} parent=5 // pred_check_branch
        %244 = sbr.rel (%p242) target = $region40
      $region39: #{tpu_custom_call.1} parent=5 // pred_region
        %s245 = ssub.s32 %s13, 2
        // Predicated region
        $region41: #{tpu_custom_call.1} parent=39 // pred_check
          %p246 = pneg %p82
        $region42: #{tpu_custom_call.1} parent=39 // pred_check_branch
          %248 = sbr.rel (%p246) target = $region44
        $region43: #{tpu_custom_call.1} parent=39 // pred_region
          %s249 = sand.u32 %s67, 1
          %s250 = scalar_lea.sflag [#allocation4], %s249
          %s251 = sand.u32 %s67, 1
          %s252 = smul.addr %s251, 2
          %s253 = scalar_lea.vmem [#allocation5], %s252
          %254 = dma.done %s250, 32
        $region44: #{tpu_custom_call.1} parent=39 // pred_fallthru
          _
      $region40: #{tpu_custom_call.1} parent=5 // pred_fallthru
        _
    $region6: #{tpu_custom_call.1} parent=1 // loop_footer
      %s17 = sadd.s32 1, %s13
    $region7: #{tpu_custom_call.1} parent=1 // loop_footer_branch
      %12 = sbr.rel target = $region3
    $region8: #{tpu_custom_call.1} parent=1 // loop_exit
      _
    %255 = vsyncpa [#allocation3], 1
    %s256 = scalar_lea.sflag [#allocation3], 1
    %257 = vsyncpa %s256, 1
    %258 = vsyncpa [#allocation4], 1
    %s259 = scalar_lea.sflag [#allocation4], 1
    %260 = vsyncpa %s259, 1

</llo_original>
